<compile_context>
chip_gen: v6e
topology: v6e:2x2x1
jax: 0.10.0
libtpu: 0.0.40
codegen_flags: <defaults>
</compile_context>

<pallas_src>
import functools

import jax
import jax.numpy as jnp
import numpy as np
from jax.experimental import pallas as pl
from jax.experimental.pallas import tpu as pltpu

# Module hyper-parameters (fixed at __init__ time in the PyTorch module).
OUT_DIM = 128
STUDENT_TEMP = 0.1
TEACHER_TEMP = 0.04
CENTER_MOMENTUM = 0.9


def _round_up(x, m):
    return ((x + m - 1) // m) * m


def _default_num_splits():
    """Best-effort TensorCore count (2 on v7x, 1 on v5e/v6e); fallback 1."""
    try:
        info = pltpu.get_tpu_info()
    except Exception:
        return 1
    for attr in ("num_cores", "tensorcore_count", "num_tensorcores",
                 "cores_per_chip", "core_count"):
        v = getattr(info, attr, None)
        if isinstance(v, int) and 1 <= v <= 16:
            return int(v)
    return 1


def _dino_loss_kernel(s_ref, t_ref, c_ref, loss_ref, tsum_ref, *,
                      n_rows, row_tile, tiles_per_split, needs_mask):
    """Processes a (row_tile, E) tile of student/teacher rows.

    Grid = (num_splits [parallel], tiles_per_split [arbitrary/reduction]).
    Outputs (resident across the reduction axis, one block per split):
      loss_ref : (1, 1, 1) f32  sum over rows of the per-row cross entropy
      tsum_ref : (1, 1, E) f32  column-sum of raw teacher outputs
    """
    c = pl.program_id(0)          # split index (megacore "parallel" axis)
    i = pl.program_id(1)          # row-tile within split (reduction axis)

    @pl.when(i == 0)
    def _():
        loss_ref[...] = jnp.zeros_like(loss_ref)
        tsum_ref[...] = jnp.zeros_like(tsum_ref)

    center = c_ref[...].astype(jnp.float32)                       # (1, E)

    # --- student: shifted logits + per-row logsumexp -------------------------
    s = s_ref[...].astype(jnp.float32) * (1.0 / STUDENT_TEMP)     # (TR, E)
    s = s - jnp.max(s, axis=-1, keepdims=True)
    lse = jnp.log(jnp.sum(jnp.exp(s), axis=-1, keepdims=True))    # (TR, 1)

    # --- teacher softmax (centered, temperature-scaled) ----------------------
    t_raw = t_ref[...].astype(jnp.float32)                        # (TR, E)
    t = (t_raw - center) * (1.0 / TEACHER_TEMP)
    t = t - jnp.max(t, axis=-1, keepdims=True)
    e = jnp.exp(t)
    # Exact reciprocal: approx=True perturbs normalization past the 1e-4 rtol
    # we validate against; the EUP has slack here anyway.
    p_t = e * pl.reciprocal(jnp.sum(e, axis=-1, keepdims=True))

    # --- cross entropy via identity (sum_e p_t == 1) --------------------------
    #   sum_e -p_t * log_softmax(s)_e = lse - sum_e p_t * s_shift_e
    loss_rows = lse - jnp.sum(p_t * s, axis=-1, keepdims=True)    # (TR, 1)

    if needs_mask:
        # Only the very last tile of the grid overruns the N rows. The per-row
        # loss mask is (TR,1) (negligible); the full-tile teacher sanitization
        # is pl.when-gated so only the boundary tile pays it. jnp.where is a
        # select, so garbage/NaN rows in the overrun region cannot leak.
        row0 = (c * tiles_per_split + i) * row_tile
        valid = (row0 + jax.lax.broadcasted_iota(jnp.int32, (row_tile, 1), 0)
                 ) < n_rows                                       # (TR, 1)
        loss_rows = jnp.where(valid, loss_rows, 0.0)
        is_boundary = row0 + row_tile > n_rows

        @pl.when(jnp.logical_not(is_boundary))
        def _():
            tsum_ref[0] += jnp.sum(t_raw, axis=0, keepdims=True)

        @pl.when(is_boundary)
        def _():
            t_clean = jnp.where(valid, t_raw, 0.0)
            tsum_ref[0] += jnp.sum(t_clean, axis=0, keepdims=True)
    else:
        tsum_ref[0] += jnp.sum(t_raw, axis=0, keepdims=True)

    loss_ref[0] += jnp.sum(loss_rows, axis=0, keepdims=True)


def dino_loss(student_output, teacher_output, center, *,
              row_tile=8192, num_splits=None):
    """Returns (total_loss, new_center) matching DINOLoss.forward semantics.

    Accepts f32 or bf16 student/teacher arrays; math is done in f32 in-kernel.
    """
    assert student_output.shape == teacher_output.shape
    assert student_output.ndim == 3
    B, T, E = student_output.shape
    N = B * T

    s2 = student_output.reshape(N, E)
    t2 = teacher_output.reshape(N, E)

    if num_splits is None:
        num_splits = _default_num_splits()

    # Tile size: multiple of 8 (sublane constraint), capped by the row count.
    # 8192 f32 rows -> 4 MiB/block, double-buffered x2 inputs = 16 MiB < the
    # 32 MiB scoped VMEM we request below (safe on v5e/v6e/v7x alike).
    row_tile_eff = max(8, min(int(row_tile), _round_up(N, 8)))
    row_tile_eff = _round_up(row_tile_eff, 8)

    total_tiles = -(-N // row_tile_eff)
    # Splits (one per TensorCore) must divide the tile count so that only the
    # final tile of the whole grid can be a partial (overrun) block.
    num_splits_eff = max(1, min(int(num_splits), total_tiles))
    while total_tiles % num_splits_eff:
        num_splits_eff -= 1
    tiles_per_split = total_tiles // num_splits_eff
    needs_mask = (total_tiles * row_tile_eff != N)   # grid overruns N rows

    kernel = functools.partial(
        _dino_loss_kernel,
        n_rows=N, row_tile=row_tile_eff,
        tiles_per_split=tiles_per_split, needs_mask=needs_mask)

    row_idx = lambda c, i, _t=tiles_per_split: (c * _t + i, 0)

    loss_partials, tsum_partials = pl.pallas_call(
        kernel,
        out_shape=(
            jax.ShapeDtypeStruct((num_splits_eff, 1, 1), jnp.float32),  # loss sums
            jax.ShapeDtypeStruct((num_splits_eff, 1, E), jnp.float32),  # teacher col sums
        ),
        grid_spec=pltpu.PrefetchScalarGridSpec(
            num_scalar_prefetch=0,
            grid=(num_splits_eff, tiles_per_split),
            in_specs=[
                pl.BlockSpec((row_tile_eff, E), row_idx),
                pl.BlockSpec((row_tile_eff, E), row_idx),
                pl.BlockSpec((1, E), lambda c, i: (0, 0)),
            ],
            out_specs=[
                pl.BlockSpec((1, 1, 1), lambda c, i: (c, 0, 0)),
                pl.BlockSpec((1, 1, E), lambda c, i: (c, 0, 0)),
            ],
        ),
        compiler_params=pltpu.CompilerParams(
            dimension_semantics=("parallel", "arbitrary"),
            vmem_limit_bytes=32 * 1024 * 1024),
    )(s2, t2, center)

    inv_n = 1.0 / float(N)
    loss = jnp.sum(loss_partials) * inv_n
    batch_center = jnp.sum(tsum_partials[:, 0, :], axis=0, keepdims=True) * inv_n
    new_center = center * CENTER_MOMENTUM + batch_center * (1.0 - CENTER_MOMENTUM)
    return loss, new_center


def dino_loss_reference(student_output, teacher_output, center):
    """Plain-JAX reference (mirrors the PyTorch forward)."""
    B, T, E = student_output.shape
    s = student_output.reshape(B * T, E).astype(jnp.float32)
    t = teacher_output.reshape(B * T, E).astype(jnp.float32)
    student_log = jax.nn.log_softmax(s / STUDENT_TEMP, axis=-1)
    teacher_dists = jax.nn.softmax((t - center) / TEACHER_TEMP, axis=-1)
    loss = jnp.mean(jnp.sum(-teacher_dists * student_log, axis=-1))
    batch_center = jnp.mean(t, axis=0)
    new_center = center * CENTER_MOMENTUM + batch_center * (1.0 - CENTER_MOMENTUM)
    return loss, new_center


if __name__ == "__main__":
    key = jax.random.PRNGKey(0)
    k1, k2, k3, k4 = jax.random.split(key, 4)

    E = OUT_DIM
    # register_buffer('center', torch.zeros(1, out_dim))
    center = jnp.zeros((1, E), dtype=jnp.float32)

    # 1) Small (b t e) case from the module spec (single tile, no overrun).
    B, T = 2, 8
    student = jax.random.normal(k1, (B, T, E), dtype=jnp.float32)
    teacher = jax.random.normal(k2, (B, T, E), dtype=jnp.float32)
    loss, new_center = dino_loss(student, teacher, center)
    jax.block_until_ready((loss, new_center))
    ref_loss, ref_center = dino_loss_reference(student, teacher, center)
    assert np.allclose(np.asarray(loss), np.asarray(ref_loss), rtol=1e-4, atol=1e-5)
    assert np.allclose(np.asarray(new_center), np.asarray(ref_center), rtol=1e-4, atol=1e-5)

    # 2) Ragged row count + 2-way split grid -> exercises multi-tile reduction,
    #    the pl.when-gated boundary tile, and the no-pad overrun path.
    B2, T2 = 4, 50
    student2 = jax.random.normal(k3, (B2, T2, E), dtype=jnp.float32)
    teacher2 = jax.random.normal(k4, (B2, T2, E), dtype=jnp.float32)
    loss2, new_center2 = dino_loss(student2, teacher2, center, row_tile=64, num_splits=2)
    jax.block_until_ready((loss2, new_center2))
    ref_loss2, ref_center2 = dino_loss_reference(student2, teacher2, center)
    assert np.allclose(np.asarray(loss2), np.asarray(ref_loss2), rtol=1e-4, atol=1e-5)
    assert np.allclose(np.asarray(new_center2), np.asarray(ref_center2), rtol=1e-4, atol=1e-5)

    # 3) bf16 inputs (halves HBM traffic; kernel computes in f32 after cast).
    s_bf = student.astype(jnp.bfloat16)
    t_bf = teacher.astype(jnp.bfloat16)
    loss3, new_center3 = dino_loss(s_bf, t_bf, center)
    jax.block_until_ready((loss3, new_center3))
    ref_loss3, ref_center3 = dino_loss_reference(
        s_bf.astype(jnp.float32), t_bf.astype(jnp.float32), center)
    assert np.allclose(np.asarray(loss3), np.asarray(ref_loss3), rtol=1e-3, atol=1e-3)
    assert np.allclose(np.asarray(new_center3), np.asarray(ref_center3), rtol=1e-3, atol=1e-3)

    print("KERNEL_OK")
</pallas_src>

<mosaic_0001>
module attributes {stable_mosaic.version = 11 : i64} {
  func.func @_dino_loss_kernel(%arg0: i32, %arg1: i32, %arg2: memref<16x128xf32, #tpu.memory_space<vmem>>, %arg3: memref<16x128xf32, #tpu.memory_space<vmem>>, %arg4: memref<1x128xf32, #tpu.memory_space<vmem>>, %arg5: memref<1x1x1xf32, #tpu.memory_space<vmem>>, %arg6: memref<1x1x128xf32, #tpu.memory_space<vmem>>) attributes {dimension_semantics = [#tpu.dimension_semantics<parallel>, #tpu.dimension_semantics<arbitrary>], iteration_bounds = array<i64: 1, 1>, scalar_prefetch = 0 : i64, scratch_operands = 0 : i64, tpu.core_type = #tpu.core_type<tc>, window_params = [{transform_indices = @transform_0, window_bounds = array<i64: 16, 128>}, {transform_indices = @transform_1, window_bounds = array<i64: 16, 128>}, {pipeline_mode = #tpu.pipeline_mode<synchronous>, transform_indices = @transform_2, window_bounds = array<i64: 1, 128>}, {transform_indices = @transform_3, window_bounds = array<i64: 1, 1, 1>}, {transform_indices = @transform_4, window_bounds = array<i64: 1, 1, 128>}]} {
    %c0_i32 = arith.constant 0 : i32
    %0 = arith.cmpi eq, %arg1, %c0_i32 : i32
    %1 = arith.extui %0 : i1 to i32
    %c0_i32_0 = arith.constant 0 : i32
    %2 = arith.cmpi ne, %1, %c0_i32_0 : i32
    scf.if %2 {
      %cst_26 = arith.constant 0.000000e+00 : f32
      %50 = vector.broadcast %cst_26 : f32 to vector<1x1x1xf32>
      %c0_27 = arith.constant 0 : index
      %c0_28 = arith.constant 0 : index
      %c0_29 = arith.constant 0 : index
      %51 = vector.load %arg5[%c0_27, %c0_28, %c0_29] : memref<1x1x1xf32, #tpu.memory_space<vmem>>, vector<1x1x1xf32>
      tpu.vector_store %arg5[%c0_27, %c0_28, %c0_29], %50 {strides = array<i32>} : memref<1x1x1xf32, #tpu.memory_space<vmem>>, vector<1x1x1xf32>,
      %cst_30 = arith.constant 0.000000e+00 : f32
      %52 = vector.broadcast %cst_30 : f32 to vector<1x1x128xf32>
      %c0_31 = arith.constant 0 : index
      %c0_32 = arith.constant 0 : index
      %c0_33 = arith.constant 0 : index
      %53 = vector.load %arg6[%c0_31, %c0_32, %c0_33] : memref<1x1x128xf32, #tpu.memory_space<vmem>>, vector<1x1x128xf32>
      tpu.vector_store %arg6[%c0_31, %c0_32, %c0_33], %52 {strides = array<i32>} : memref<1x1x128xf32, #tpu.memory_space<vmem>>, vector<1x1x128xf32>,
    } else {
    }
    %c0 = arith.constant 0 : index
    %c0_1 = arith.constant 0 : index
    %3 = vector.load %arg4[%c0, %c0_1] : memref<1x128xf32, #tpu.memory_space<vmem>>, vector<1x128xf32>
    %c0_2 = arith.constant 0 : index
    %c0_3 = arith.constant 0 : index
    %4 = vector.load %arg2[%c0_2, %c0_3] : memref<16x128xf32, #tpu.memory_space<vmem>>, vector<16x128xf32>
    %cst = arith.constant 1.000000e+01 : f32
    %5 = vector.broadcast %cst : f32 to vector<16x128xf32>
    %6 = arith.mulf %4, %5 : vector<16x128xf32>
    %cst_4 = arith.constant dense<0xFF800000> : vector<16xf32>
    %7 = vector.multi_reduction <maximumf>, %6, %cst_4 [1] : vector<16x128xf32> to vector<16xf32>
    %8 = vector.shape_cast %7 : vector<16xf32> to vector<16x1xf32>
    %9 = vector.broadcast %8 : vector<16x1xf32> to vector<16x128xf32>
    %10 = arith.subf %6, %9 : vector<16x128xf32>
    %11 = math.exp %10 : vector<16x128xf32>
    %cst_5 = arith.constant dense<0.000000e+00> : vector<16xf32>
    %12 = vector.multi_reduction <add>, %11, %cst_5 [1] : vector<16x128xf32> to vector<16xf32>
    %13 = vector.shape_cast %12 : vector<16xf32> to vector<16x1xf32>
    %14 = math.log %13 : vector<16x1xf32>
    %c0_6 = arith.constant 0 : index
    %c0_7 = arith.constant 0 : index
    %15 = vector.load %arg3[%c0_6, %c0_7] : memref<16x128xf32, #tpu.memory_space<vmem>>, vector<16x128xf32>
    %16 = vector.broadcast %3 : vector<1x128xf32> to vector<16x128xf32>
    %17 = arith.subf %15, %16 : vector<16x128xf32>
    %cst_8 = arith.constant 2.500000e+01 : f32
    %18 = vector.broadcast %cst_8 : f32 to vector<16x128xf32>
    %19 = arith.mulf %17, %18 : vector<16x128xf32>
    %cst_9 = arith.constant dense<0xFF800000> : vector<16xf32>
    %20 = vector.multi_reduction <maximumf>, %19, %cst_9 [1] : vector<16x128xf32> to vector<16xf32>
    %21 = vector.shape_cast %20 : vector<16xf32> to vector<16x1xf32>
    %22 = vector.broadcast %21 : vector<16x1xf32> to vector<16x128xf32>
    %23 = arith.subf %19, %22 : vector<16x128xf32>
    %24 = math.exp %23 : vector<16x128xf32>
    %cst_10 = arith.constant dense<0.000000e+00> : vector<16xf32>
    %25 = vector.multi_reduction <add>, %24, %cst_10 [1] : vector<16x128xf32> to vector<16xf32>
    %26 = vector.shape_cast %25 : vector<16xf32> to vector<16x1xf32>
    %27 = tpu.reciprocal %26 : vector<16x1xf32> -> vector<16x1xf32>
    %28 = vector.broadcast %27 : vector<16x1xf32> to vector<16x128xf32>
    %29 = arith.mulf %24, %28 : vector<16x128xf32>
    %30 = arith.mulf %29, %10 : vector<16x128xf32>
    %cst_11 = arith.constant dense<0.000000e+00> : vector<16xf32>
    %31 = vector.multi_reduction <add>, %30, %cst_11 [1] : vector<16x128xf32> to vector<16xf32>
    %32 = vector.shape_cast %31 : vector<16xf32> to vector<16x1xf32>
    %33 = arith.subf %14, %32 : vector<16x1xf32>
    %c0_12 = arith.constant 0 : index
    %c0_13 = arith.constant 0 : index
    %c0_14 = arith.constant 0 : index
    %34 = vector.load %arg6[%c0_12, %c0_13, %c0_14] : memref<1x1x128xf32, #tpu.memory_space<vmem>>, vector<1x1x128xf32>
    %35 = vector.shape_cast %34 : vector<1x1x128xf32> to vector<1x128xf32>
    %cst_15 = arith.constant dense<0.000000e+00> : vector<128xf32>
    %36 = vector.multi_reduction <add>, %15, %cst_15 [0] : vector<16x128xf32> to vector<128xf32>
    %37 = vector.shape_cast %36 : vector<128xf32> to vector<1x128xf32>
    %38 = arith.addf %35, %37 : vector<1x128xf32>
    %c0_16 = arith.constant 0 : index
    %c0_17 = arith.constant 0 : index
    %c0_18 = arith.constant 0 : index
    %39 = vector.load %arg6[%c0_16, %c0_17, %c0_18] : memref<1x1x128xf32, #tpu.memory_space<vmem>>, vector<1x1x128xf32>
    %40 = vector.shape_cast %39 : vector<1x1x128xf32> to vector<1x128xf32>
    %41 = vector.shape_cast %38 : vector<1x128xf32> to vector<1x1x128xf32>
    tpu.vector_store %arg6[%c0_16, %c0_17, %c0_18], %41 {strides = array<i32>} : memref<1x1x128xf32, #tpu.memory_space<vmem>>, vector<1x1x128xf32>,
    %c0_19 = arith.constant 0 : index
    %c0_20 = arith.constant 0 : index
    %c0_21 = arith.constant 0 : index
    %42 = vector.load %arg5[%c0_19, %c0_20, %c0_21] : memref<1x1x1xf32, #tpu.memory_space<vmem>>, vector<1x1x1xf32>
    %43 = vector.shape_cast %42 : vector<1x1x1xf32> to vector<1x1xf32>
    %cst_22 = arith.constant dense<0.000000e+00> : vector<1xf32>
    %44 = vector.multi_reduction <add>, %33, %cst_22 [0] : vector<16x1xf32> to vector<1xf32>
    %45 = vector.shape_cast %44 : vector<1xf32> to vector<1x1xf32>
    %46 = arith.addf %43, %45 : vector<1x1xf32>
    %c0_23 = arith.constant 0 : index
    %c0_24 = arith.constant 0 : index
    %c0_25 = arith.constant 0 : index
    %47 = vector.load %arg5[%c0_23, %c0_24, %c0_25] : memref<1x1x1xf32, #tpu.memory_space<vmem>>, vector<1x1x1xf32>
    %48 = vector.shape_cast %47 : vector<1x1x1xf32> to vector<1x1xf32>
    %49 = vector.shape_cast %46 : vector<1x1xf32> to vector<1x1x1xf32>
    tpu.vector_store %arg5[%c0_23, %c0_24, %c0_25], %49 {strides = array<i32>} : memref<1x1x1xf32, #tpu.memory_space<vmem>>, vector<1x1x1xf32>,
    return
  }
  func.func @transform_0(%arg0: i32, %arg1: i32) -> (i32, i32) {
    %c1_i32 = arith.constant 1 : i32
    %0 = arith.muli %arg0, %c1_i32 : i32
    %1 = arith.addi %0, %arg1 : i32
    %c0_i32 = arith.constant 0 : i32
    %c0_i32_0 = arith.constant 0 : i32
    return %1, %c0_i32 : i32, i32
  }
  func.func @transform_1(%arg0: i32, %arg1: i32) -> (i32, i32) {
    %c1_i32 = arith.constant 1 : i32
    %0 = arith.muli %arg0, %c1_i32 : i32
    %1 = arith.addi %0, %arg1 : i32
    %c0_i32 = arith.constant 0 : i32
    %c0_i32_0 = arith.constant 0 : i32
    return %1, %c0_i32 : i32, i32
  }
  func.func @transform_2(%arg0: i32, %arg1: i32) -> (i32, i32) {
    %c0_i32 = arith.constant 0 : i32
    %c0_i32_0 = arith.constant 0 : i32
    %c0_i32_1 = arith.constant 0 : i32
    return %c0_i32, %c0_i32_0 : i32, i32
  }
  func.func @transform_3(%arg0: i32, %arg1: i32) -> (i32, i32, i32) {
    %c0_i32 = arith.constant 0 : i32
    %c0_i32_0 = arith.constant 0 : i32
    %c0_i32_1 = arith.constant 0 : i32
    return %arg0, %c0_i32, %c0_i32_0 : i32, i32, i32
  }
  func.func @transform_4(%arg0: i32, %arg1: i32) -> (i32, i32, i32) {
    %c0_i32 = arith.constant 0 : i32
    %c0_i32_0 = arith.constant 0 : i32
    %c0_i32_1 = arith.constant 0 : i32
    return %arg0, %c0_i32, %c0_i32_0 : i32, i32, i32
  }
}

</mosaic_0001>

<llo_original>
// kernel: tpu_custom_call.1
$region0: #{tpu_custom_call.1}
  #allocation0 [shape = 'u32[]', space=smem, size = 0x4, offset = 0x4, fixed_abs, tag = 'smem constant byte address 0x4 - core index']
  #allocation1 [shape = 'u32[144,128]{1,0:T(1,128)}', space=vmem, size = 0x12000, scoped, tag = 'internal scratch']
  %s0 = inlined_call_operand.hbm [shape: f32[16,128], index: 0, kind: input, shape index: {}]
  %s1 = inlined_call_operand.hbm [shape: f32[16,128], index: 1, kind: input, shape index: {}]
  %s2 = inlined_call_operand.vmem [shape: f32[1,128], index: 2, kind: input, shape index: {}]
  %s3 = inlined_call_operand.hbm [shape: f32[1,1,1], index: 3, kind: output, shape index: {0}]
  %s4 = inlined_call_operand.hbm [shape: f32[1,1,128], index: 4, kind: output, shape index: {1}]
  %5 = xla_tuple %s3, %s4
  %s6 = sld [smem:[#allocation0]]
  $region42: #{tpu_custom_call.1} parent=0
    _
  %s8 = ssub.s32 1, %s6
  %s9 = scalar_select 0, %s8, %s6
  $region1: #{tpu_custom_call.1} parent=0
    #allocation2 [shape = 'u8[8192]{0}', space=vmem, size = 0x2000, scoped, tag = 'input window, operand 0, single buffered']
    #allocation3 [shape = 's32[1]{0}', space=sflag, size = 0x4, scoped, tag = 'scoped memory for tpu_custom_call.1']
    #allocation4 [shape = 's32[1]{0}', space=sflag, size = 0x4, scoped, tag = 'scoped memory for tpu_custom_call.1']
    #allocation5 [shape = 'u8[8192]{0}', space=vmem, size = 0x2000, scoped, tag = 'input window, operand 1, single buffered']
    #allocation6 [shape = 's32[1]{0}', space=sflag, size = 0x4, scoped, tag = 'scoped memory for tpu_custom_call.1']
    #allocation7 [shape = 'u8[512]{0}', space=vmem, size = 0x400, scoped, tag = 'output window, operand 0, single buffered']
    #allocation8 [shape = 'u8[512]{0}', space=vmem, size = 0x400, scoped, tag = 'output window, operand 1, single buffered']
    #allocation9 [shape = 's32[1]{0}', space=sflag, size = 0x4, scoped, tag = 'scoped memory for tpu_custom_call.1']
    %10 = vsyncpa [#allocation3], 0
    %11 = vsyncpa [#allocation6], 0
    %12 = vsyncpa [#allocation4], 0
    %13 = vsyncpa [#allocation9], 0
    // Predicated region
    $region2: #{tpu_custom_call.1} parent=1 // pred_check
      _
    $region3: #{tpu_custom_call.1} parent=1 // pred_check_branch
      %15 = sbr.rel (0) target = $region5
    $region4: #{tpu_custom_call.1} parent=1 // pred_region
      %s16 = sadd.s32 0, 0
      %s17 = smul.u32 2, %s16
      %s19 = ssub.s32 256, 256
      %20 = vsyncadd [#allocation3], %s19
      %s21 = smul.addr %s17, 128
      %s22 = scalar_lea.hbm %s0, %s21
      %s23 = sshll.u32 [#allocation2], 4
      %s24 = int_to_ptr.vmem [resolvable:$true] %s23
      %29 = dma.hbm_to_vmem [thread:$0]  %s22, 256, %s24, [#allocation3], 128, 128, 8
    $region5: #{tpu_custom_call.1} parent=1 // pred_fallthru
      _
    // Predicated region
    $region6: #{tpu_custom_call.1} parent=1 // pred_check
      _
    $region7: #{tpu_custom_call.1} parent=1 // pred_check_branch
      %31 = sbr.rel (0) target = $region9
    $region8: #{tpu_custom_call.1} parent=1 // pred_region
      %s32 = sadd.s32 0, 0
      %s33 = smul.u32 2, %s32
      %s35 = ssub.s32 256, 256
      %36 = vsyncadd [#allocation6], %s35
      %s37 = smul.addr %s33, 128
      %s38 = scalar_lea.hbm %s1, %s37
      %s39 = sshll.u32 [#allocation5], 4
      %s40 = int_to_ptr.vmem [resolvable:$true] %s39
      %45 = dma.hbm_to_vmem [thread:$0]  %s38, 256, %s40, [#allocation6], 128, 128, 8
    $region9: #{tpu_custom_call.1} parent=1 // pred_fallthru
      _
    // Predicated region
    $region10: #{tpu_custom_call.1} parent=1 // pred_check
      _
    $region11: #{tpu_custom_call.1} parent=1 // pred_check_branch
      %47 = sbr.rel (0) target = $region13
    $region12: #{tpu_custom_call.1} parent=1 // pred_region
      _
    $region13: #{tpu_custom_call.1} parent=1 // pred_fallthru
      _
    // Predicated region
    $region14: #{tpu_custom_call.1} parent=1 // pred_check
      _
    $region15: #{tpu_custom_call.1} parent=1 // pred_check_branch
      %49 = sbr.rel (0) target = $region17
    $region16: #{tpu_custom_call.1} parent=1 // pred_region
      %50 = dma.done [#allocation3], 256
    $region17: #{tpu_custom_call.1} parent=1 // pred_fallthru
      _
    // Predicated region
    $region18: #{tpu_custom_call.1} parent=1 // pred_check
      _
    $region19: #{tpu_custom_call.1} parent=1 // pred_check_branch
      %52 = sbr.rel (0) target = $region21
    $region20: #{tpu_custom_call.1} parent=1 // pred_region
      %53 = dma.done [#allocation6], 256
    $region21: #{tpu_custom_call.1} parent=1 // pred_fallthru
      _
    %s54 = sadd.s32 0, 0
    %s55 = smul.u32 2, %s54
    %s56 = sadd.s32 0, 0
    %s57 = smul.u32 2, %s56
    %p58 = scmp.eq.s32.totalorder 0, 0
    // Predicated region
    $region22: #{tpu_custom_call.1} parent=1 // pred_check
      %p59 = pneg %p58
    $region23: #{tpu_custom_call.1} parent=1 // pred_check_branch
      %61 = sbr.rel (%p59) target = $region25
    $region24: #{tpu_custom_call.1} parent=1 // pred_region
      %vm62 = vcmask 0
      %63 = vst.msk [vmem:[#allocation7] sm:$0x1] %vm62, 0.0
      %64 = vst [vmem:[#allocation8] sm:$0x1] 0.0
    $region25: #{tpu_custom_call.1} parent=1 // pred_fallthru
      _
    %v65 = vld [vmem:[%s2] sm:$0x1]
    %v66 = vld [vmem:[#allocation2] sm:$0xff]
    %v67 = vld [vmem:[#allocation2 + $0x8] sm:$0xff]
    %v68 = vmul.f32 %v66, 10.0
    %v69 = vmul.f32 %v67, 10.0
    %70 = vmax.xlane.f32.xlu0 %v68
    %v71 = vpop.xlane.xlu0 %70
    %72 = vmax.xlane.f32.xlu0 %v69
    %v73 = vpop.xlane.xlu0 %72
    %v74 = vsub.f32 %v68, %v71
    %v75 = vsub.f32 %v69, %v73
    %v76 = vmul.f32 %v74, 1.442695
    %v77 = vpow.pop %v76
    %v78 = vmul.f32 %v75, 1.442695
    %v79 = vpow.pop %v78
    %80 = vadd.xlane.f32.xlu0 %v77
    %v81 = vpop.xlane.xlu0 %80
    %82 = vadd.xlane.f32.xlu0 %v79
    %v83 = vpop.xlane.xlu0 %82
    %v84 = vlog2.pop %v81
    %v85 = vmul.f32 %v84, 0.6931472
    %v86 = vlog2.pop %v83
    %v87 = vmul.f32 %v86, 0.6931472
    %v88 = vld [vmem:[#allocation5] sm:$0xff]
    %v89 = vld [vmem:[#allocation5 + $0x8] sm:$0xff]
    %v91 = vlaneseq
    %v92 = vshrl.u32 %v91, 7
    %v93 = vsub.s32 0, %v92
    %v94 = vrot.slane %v65, %v93
    %v96 = vsub.f32 %v88, %v94
    %v97 = vsub.f32 %v89, %v94
    %v98 = vmul.f32 %v96, 25.0
    %v99 = vmul.f32 %v97, 25.0
    %100 = vmax.xlane.f32.xlu0 %v98
    %v101 = vpop.xlane.xlu0 %100
    %102 = vmax.xlane.f32.xlu0 %v99
    %v103 = vpop.xlane.xlu0 %102
    %v104 = vsub.f32 %v98, %v101
    %v105 = vsub.f32 %v99, %v103
    %v106 = vmul.f32 %v104, 1.442695
    %v107 = vpow.pop %v106
    %v108 = vmul.f32 %v105, 1.442695
    %v109 = vpow.pop %v108
    %110 = vadd.xlane.f32.xlu0 %v107
    %v111 = vpop.xlane.xlu0 %110
    %112 = vadd.xlane.f32.xlu0 %v109
    %v113 = vpop.xlane.xlu0 %112
    %v114 = vrcp.pop %v111
    %v115 = vrcp.pop %v113
    %v116 = vmul.f32 %v107, %v114
    %v117 = vmul.f32 %v109, %v115
    %v118 = vmul.f32 %v116, %v74
    %v119 = vmul.f32 %v117, %v75
    %120 = vadd.xlane.f32.xlu0 %v118
    %v121 = vpop.xlane.xlu0 %120
    %122 = vadd.xlane.f32.xlu0 %v119
    %v123 = vpop.xlane.xlu0 %122
    %v124 = vsub.f32 %v85, %v121
    %v125 = vsub.f32 %v87, %v123
    %v126 = vld [vmem:[#allocation8] sm:$0x1]
    %v127 = vadd.f32 %v88, %v89
    %v128 = vrot.slane %v127, 4
    %v129 = vadd.f32 %v127, %v128
    %v130 = vrot.slane %v129, 2
    %v131 = vadd.f32 %v129, %v130
    %v132 = vrot.slane %v131, 1
    %v133 = vadd.f32 %v131, %v132
    %v134 = vadd.f32 %v126, %v133
    %135 = vst [vmem:[#allocation8] sm:$0x1] %v134
    %v136 = vld [vmem:[#allocation7] sm:$0x1]
    %v137 = vadd.f32 %v124, %v125
    %v138 = vrot.slane %v137, 4
    %v139 = vadd.f32 %v137, %v138
    %v140 = vrot.slane %v139, 2
    %v141 = vadd.f32 %v139, %v140
    %v142 = vrot.slane %v141, 1
    %v143 = vadd.f32 %v141, %v142
    %v144 = vadd.f32 %v136, %v143
    %vm145 = vcmask 0
    %146 = vst.msk [vmem:[#allocation7] sm:$0x1] %vm145, %v144
    // Predicated region
    $region26: #{tpu_custom_call.1} parent=1 // pred_check
      _
    $region27: #{tpu_custom_call.1} parent=1 // pred_check_branch
      %148 = sbr.rel (0) target = $region29
    $region28: #{tpu_custom_call.1} parent=1 // pred_region
      %s150 = ssub.s32 16, 16
      %151 = vsyncadd [#allocation4], %s150
      %s153 = sshll.u32 [#allocation7], 4
      %s154 = int_to_ptr.vmem [resolvable:$true] %s153
      %156 = dma.vmem_to_hbm [thread:$0]  %s154, 16, %s3, [#allocation4]
    $region29: #{tpu_custom_call.1} parent=1 // pred_fallthru
      _
    // Predicated region
    $region30: #{tpu_custom_call.1} parent=1 // pred_check
      _
    $region31: #{tpu_custom_call.1} parent=1 // pred_check_branch
      %158 = sbr.rel (0) target = $region33
    $region32: #{tpu_custom_call.1} parent=1 // pred_region
      %s160 = ssub.s32 16, 16
      %161 = vsyncadd [#allocation9], %s160
      %s163 = sshll.u32 [#allocation8], 4
      %s164 = int_to_ptr.vmem [resolvable:$true] %s163
      %166 = dma.vmem_to_hbm [thread:$0]  %s164, 16, %s4, [#allocation9]
    $region33: #{tpu_custom_call.1} parent=1 // pred_fallthru
      _
    // Predicated region
    $region34: #{tpu_custom_call.1} parent=1 // pred_check
      _
    $region35: #{tpu_custom_call.1} parent=1 // pred_check_branch
      %168 = sbr.rel (0) target = $region37
    $region36: #{tpu_custom_call.1} parent=1 // pred_region
      %169 = dma.done [#allocation4], 16
    $region37: #{tpu_custom_call.1} parent=1 // pred_fallthru
      _
    // Predicated region
    $region38: #{tpu_custom_call.1} parent=1 // pred_check
      _
    $region39: #{tpu_custom_call.1} parent=1 // pred_check_branch
      %171 = sbr.rel (0) target = $region41
    $region40: #{tpu_custom_call.1} parent=1 // pred_region
      %172 = dma.done [#allocation9], 16
    $region41: #{tpu_custom_call.1} parent=1 // pred_fallthru
      _
    %173 = vsyncpa [#allocation3], 1
    %174 = vsyncpa [#allocation6], 1
    %175 = vsyncpa [#allocation4], 1
    %176 = vsyncpa [#allocation9], 1

</llo_original>
